<compile_context>
chip_gen: v6e
topology: v6e:2x2x1
jax: 0.10.0
libtpu: 0.0.40
codegen_flags: <defaults>
</compile_context>

<pallas_src>
import functools

import jax
import jax.numpy as jnp
from jax.experimental import pallas as pl
from jax.experimental.pallas import tpu as pltpu

INPUT_SIZE = 2
HIDDEN_SIZE = 64
OUTPUT_SIZE = 2

LANE = 128      # lane width: hidden / output dims padded to this for lane-dense tiles
SUBLANE = 8     # f32 sublane packing: batch padded to this


def rnn_fc_sigmoid_kernel(x_ref, w_ih_ref, w_hh_ref, b_ref, w_fc_ref, b_fc_ref,
                          out_ref, *, T, B, I):
    # x_ref:   (T*B, I)   time-major flattened input (batch padded), f32
    # w_ih_ref:(I, Hp)    input->hidden weight (transposed, hidden-padded), f32
    # w_hh_ref:(Hp, Hp)   hidden->hidden weight (transposed, padded), bf16
    # b_ref:   (1, Hp)    b_ih + b_hh (padded with zeros), f32
    # w_fc_ref:(Hp, Op)   fc weight (transposed, padded with zeros), bf16
    # b_fc_ref:(1, Op)    fc bias (padded with zeros), f32
    # out_ref: (B, Op)    lane-dense output; real values live in [:, :O]

    # Input projection for ALL timesteps, hoisted off the serial chain.
    # K = I = 2 is a degenerate MXU contraction, so do it as I broadcast FMAs on the
    # VPU instead of a matmul (avoids an MXU pass and a lane-sparse matmul operand).
    u = b_ref[...]                                            # (1, Hp)
    for i in range(I):
        u = u + x_ref[:, i:i + 1] * w_ih_ref[i:i + 1, :]      # -> (T*B, Hp)

    # Recurrent weight loaded once; h carried as a register value.
    w_hh = w_hh_ref[...]                                      # (Hp, Hp) bf16

    # h0 == 0  =>  first step is just tanh(u[0]); skip the zero matmul.
    h = jnp.tanh(u[0:B, :])                                   # (B, Hp) f32

    # Fully unrolled recurrence: one (B,Hp)@(Hp,Hp) bf16 MXU matmul + f32 tanh per step.
    # TODO(synk): for large T, spill u to a VMEM scratch + lax.fori_loop(unroll=True) to
    # bound register pressure, and verify in the bundle dump that Mosaic hoists the W_hh
    # RHS push out of this unrolled loop (else drive pltpu.matmul_push_rhs/_acc_lhs/_pop).
    for t in range(1, T):
        hv = jnp.dot(h.astype(w_hh.dtype), w_hh,
                     preferred_element_type=jnp.float32)      # (B, Hp)
        h = jnp.tanh(u[t * B:(t + 1) * B, :] + hv)

    logits = (jnp.dot(h.astype(w_fc_ref.dtype), w_fc_ref[...],
                      preferred_element_type=jnp.float32)
              + b_fc_ref[...])                                # (B, Op)
    out_ref[...] = jax.nn.sigmoid(logits)                     # full-lane, unmasked store


def prepare_params(w_ih, w_hh, b_ih, b_hh, w_fc, b_fc):
    """One-time weight layout: transpose, zero-pad hidden/output dims to the lane width,
    fold the two RNN biases, and cast the MXU operands to bf16."""
    H, I = w_ih.shape
    O = w_fc.shape[0]
    Hp = ((H + LANE - 1) // LANE) * LANE
    Op = ((O + LANE - 1) // LANE) * LANE

    w_ih_t = jnp.zeros((I, Hp), jnp.float32).at[:, :H].set(jnp.transpose(w_ih))
    w_hh_t = jnp.zeros((Hp, Hp), jnp.float32).at[:H, :H].set(jnp.transpose(w_hh))
    b = jnp.zeros((1, Hp), jnp.float32).at[0, :H].set(b_ih + b_hh)
    w_fc_t = jnp.zeros((Hp, Op), jnp.float32).at[:H, :O].set(jnp.transpose(w_fc))
    b_fc_p = jnp.zeros((1, Op), jnp.float32).at[0, :O].set(b_fc)

    return dict(
        w_ih=w_ih_t,                        # f32 (used in VPU FMAs; v5e has no bf16 VPU)
        w_hh=w_hh_t.astype(jnp.bfloat16),   # MXU operand
        b=b,
        w_fc=w_fc_t.astype(jnp.bfloat16),   # MXU operand
        b_fc=b_fc_p,
    )


@functools.partial(jax.jit, static_argnames=("out_size",))
def _rnn_model_forward_impl(x, params, out_size):
    B, T, I = x.shape
    Op = params["w_fc"].shape[1]

    # Pad batch to a sublane multiple so every load/store is a full-tile op.
    Bp = ((B + SUBLANE - 1) // SUBLANE) * SUBLANE
    x_tm = jnp.transpose(x, (1, 0, 2))                        # (T, B, I) time-major
    if Bp != B:
        x_tm = jnp.pad(x_tm, ((0, 0), (0, Bp - B), (0, 0)))
    x2d = x_tm.reshape(T * Bp, I).astype(jnp.float32)         # (T*Bp, I)

    kernel = functools.partial(rnn_fc_sigmoid_kernel, T=T, B=Bp, I=I)
    vmem = pl.BlockSpec(memory_space=pltpu.MemorySpace.VMEM)

    # TODO(synk): if T/B grow beyond toy sizes, add a grid over T ('arbitrary', x tiled
    # via BlockSpec sized against v7x's 64 MiB VMEM) plus a leading 'parallel' batch axis
    # so v7x's two TensorCores each take half the batch.
    out = pl.pallas_call(
        kernel,
        out_shape=jax.ShapeDtypeStruct((Bp, Op), jnp.float32),
        in_specs=[vmem] * 6,
        out_specs=vmem,
    )(x2d, params["w_ih"], params["w_hh"], params["b"],
      params["w_fc"], params["b_fc"])
    return out[:B, :out_size]


def rnn_model_forward(x, params, out_size=OUTPUT_SIZE):
    """x: (B, T, I) float32, PyTorch batch_first convention. Returns (B, out_size)."""
    return _rnn_model_forward_impl(x, params, out_size=out_size)


def _reference_forward(x, w_ih, w_hh, b_ih, b_hh, w_fc, b_fc):
    B, T, I = x.shape
    H = w_hh.shape[0]
    h = jnp.zeros((B, H), jnp.float32)
    for t in range(T):
        h = jnp.tanh(x[:, t, :] @ w_ih.T + b_ih + h @ w_hh.T + b_hh)
    return jax.nn.sigmoid(h @ w_fc.T + b_fc)


if __name__ == "__main__":
    B, T = 2, 8
    I, H, O = INPUT_SIZE, HIDDEN_SIZE, OUTPUT_SIZE

    key = jax.random.PRNGKey(0)
    kx, k1, k2, k3, k4, k5, k6 = jax.random.split(key, 7)

    # Deterministic parameter init, uniform(-1/sqrt(H), 1/sqrt(H)) like nn.RNN/Linear.
    bound = 1.0 / (H ** 0.5)
    x = jax.random.normal(kx, (B, T, I), dtype=jnp.float32)
    w_ih = jax.random.uniform(k1, (H, I), jnp.float32, -bound, bound)
    w_hh = jax.random.uniform(k2, (H, H), jnp.float32, -bound, bound)
    b_ih = jax.random.uniform(k3, (H,), jnp.float32, -bound, bound)
    b_hh = jax.random.uniform(k4, (H,), jnp.float32, -bound, bound)
    w_fc = jax.random.uniform(k5, (O, H), jnp.float32, -bound, bound)
    b_fc = jax.random.uniform(k6, (O,), jnp.float32, -bound, bound)

    params = prepare_params(w_ih, w_hh, b_ih, b_hh, w_fc, b_fc)

    out = rnn_model_forward(x, params)
    out = jax.block_until_ready(out)

    ref = _reference_forward(x, w_ih, w_hh, b_ih, b_hh, w_fc, b_fc)
    assert out.shape == (B, O)
    # bf16 MXU weights with f32 accumulation: tolerance relaxed vs pure-f32 reference.
    assert jnp.allclose(out, ref, atol=2e-2, rtol=2e-2), (
        f"max abs diff {jnp.max(jnp.abs(out - ref))}")

    print("KERNEL_OK")
</pallas_src>

<mosaic_0001>
module attributes {stable_mosaic.version = 11 : i64} {
  func.func @rnn_fc_sigmoid_kernel(%arg0: memref<64x2xf32, #tpu.memory_space<vmem>>, %arg1: memref<2x128xf32, #tpu.memory_space<vmem>>, %arg2: memref<128x128xbf16, #tpu.memory_space<vmem>>, %arg3: memref<1x128xf32, #tpu.memory_space<vmem>>, %arg4: memref<128x128xbf16, #tpu.memory_space<vmem>>, %arg5: memref<1x128xf32, #tpu.memory_space<vmem>>, %arg6: memref<8x128xf32, #tpu.memory_space<vmem>>) attributes {dimension_semantics = [], scalar_prefetch = 0 : i64, scratch_operands = 0 : i64, tpu.core_type = #tpu.core_type<tc>} {
    %c0 = arith.constant 0 : index
    %c0_0 = arith.constant 0 : index
    %0 = vector.load %arg3[%c0, %c0_0] : memref<1x128xf32, #tpu.memory_space<vmem>>, vector<1x128xf32>
    %c0_1 = arith.constant 0 : index
    %c0_2 = arith.constant 0 : index
    %1 = vector.load %arg0[%c0_1, %c0_2] : memref<64x2xf32, #tpu.memory_space<vmem>>, vector<64x1xf32>
    %c0_3 = arith.constant 0 : index
    %c0_4 = arith.constant 0 : index
    %2 = vector.load %arg1[%c0_3, %c0_4] : memref<2x128xf32, #tpu.memory_space<vmem>>, vector<1x128xf32>
    %3 = vector.broadcast %1 : vector<64x1xf32> to vector<64x128xf32>
    %4 = vector.broadcast %2 : vector<1x128xf32> to vector<64x128xf32>
    %5 = arith.mulf %3, %4 : vector<64x128xf32>
    %6 = vector.broadcast %0 : vector<1x128xf32> to vector<64x128xf32>
    %7 = arith.addf %6, %5 : vector<64x128xf32>
    %c0_5 = arith.constant 0 : index
    %c1 = arith.constant 1 : index
    %8 = vector.load %arg0[%c0_5, %c1] : memref<64x2xf32, #tpu.memory_space<vmem>>, vector<64x1xf32>
    %c1_6 = arith.constant 1 : index
    %c0_7 = arith.constant 0 : index
    %9 = vector.load %arg1[%c1_6, %c0_7] : memref<2x128xf32, #tpu.memory_space<vmem>>, vector<1x128xf32>
    %10 = vector.broadcast %8 : vector<64x1xf32> to vector<64x128xf32>
    %11 = vector.broadcast %9 : vector<1x128xf32> to vector<64x128xf32>
    %12 = arith.mulf %10, %11 : vector<64x128xf32>
    %13 = arith.addf %7, %12 : vector<64x128xf32>
    %c0_8 = arith.constant 0 : index
    %c0_9 = arith.constant 0 : index
    %14 = vector.load %arg2[%c0_8, %c0_9] : memref<128x128xbf16, #tpu.memory_space<vmem>>, vector<128x128xbf16>
    %15 = vector.extract_strided_slice %13 {offsets = [0, 0], sizes = [8, 128], strides = [1, 1]} : vector<64x128xf32> to vector<8x128xf32>
    %16 = math.tanh %15 : vector<8x128xf32>
    %17 = arith.truncf %16 : vector<8x128xf32> to vector<8x128xbf16>
    %cst = arith.constant dense<0.000000e+00> : vector<8x128xf32>
    %18 = tpu.matmul %17, %14, %cst {dimension_numbers = #tpu.dot_dimension_numbers<[1], [0], [0], [1], [0, 0, 1, 1], [], []>} : vector<8x128xbf16>, vector<128x128xbf16>, vector<8x128xf32> -> vector<8x128xf32>
    %19 = vector.extract_strided_slice %13 {offsets = [8, 0], sizes = [8, 128], strides = [1, 1]} : vector<64x128xf32> to vector<8x128xf32>
    %20 = arith.addf %19, %18 : vector<8x128xf32>
    %21 = math.tanh %20 : vector<8x128xf32>
    %22 = arith.truncf %21 : vector<8x128xf32> to vector<8x128xbf16>
    %cst_10 = arith.constant dense<0.000000e+00> : vector<8x128xf32>
    %23 = tpu.matmul %22, %14, %cst_10 {dimension_numbers = #tpu.dot_dimension_numbers<[1], [0], [0], [1], [0, 0, 1, 1], [], []>} : vector<8x128xbf16>, vector<128x128xbf16>, vector<8x128xf32> -> vector<8x128xf32>
    %24 = vector.extract_strided_slice %13 {offsets = [16, 0], sizes = [8, 128], strides = [1, 1]} : vector<64x128xf32> to vector<8x128xf32>
    %25 = arith.addf %24, %23 : vector<8x128xf32>
    %26 = math.tanh %25 : vector<8x128xf32>
    %27 = arith.truncf %26 : vector<8x128xf32> to vector<8x128xbf16>
    %cst_11 = arith.constant dense<0.000000e+00> : vector<8x128xf32>
    %28 = tpu.matmul %27, %14, %cst_11 {dimension_numbers = #tpu.dot_dimension_numbers<[1], [0], [0], [1], [0, 0, 1, 1], [], []>} : vector<8x128xbf16>, vector<128x128xbf16>, vector<8x128xf32> -> vector<8x128xf32>
    %29 = vector.extract_strided_slice %13 {offsets = [24, 0], sizes = [8, 128], strides = [1, 1]} : vector<64x128xf32> to vector<8x128xf32>
    %30 = arith.addf %29, %28 : vector<8x128xf32>
    %31 = math.tanh %30 : vector<8x128xf32>
    %32 = arith.truncf %31 : vector<8x128xf32> to vector<8x128xbf16>
    %cst_12 = arith.constant dense<0.000000e+00> : vector<8x128xf32>
    %33 = tpu.matmul %32, %14, %cst_12 {dimension_numbers = #tpu.dot_dimension_numbers<[1], [0], [0], [1], [0, 0, 1, 1], [], []>} : vector<8x128xbf16>, vector<128x128xbf16>, vector<8x128xf32> -> vector<8x128xf32>
    %34 = vector.extract_strided_slice %13 {offsets = [32, 0], sizes = [8, 128], strides = [1, 1]} : vector<64x128xf32> to vector<8x128xf32>
    %35 = arith.addf %34, %33 : vector<8x128xf32>
    %36 = math.tanh %35 : vector<8x128xf32>
    %37 = arith.truncf %36 : vector<8x128xf32> to vector<8x128xbf16>
    %cst_13 = arith.constant dense<0.000000e+00> : vector<8x128xf32>
    %38 = tpu.matmul %37, %14, %cst_13 {dimension_numbers = #tpu.dot_dimension_numbers<[1], [0], [0], [1], [0, 0, 1, 1], [], []>} : vector<8x128xbf16>, vector<128x128xbf16>, vector<8x128xf32> -> vector<8x128xf32>
    %39 = vector.extract_strided_slice %13 {offsets = [40, 0], sizes = [8, 128], strides = [1, 1]} : vector<64x128xf32> to vector<8x128xf32>
    %40 = arith.addf %39, %38 : vector<8x128xf32>
    %41 = math.tanh %40 : vector<8x128xf32>
    %42 = arith.truncf %41 : vector<8x128xf32> to vector<8x128xbf16>
    %cst_14 = arith.constant dense<0.000000e+00> : vector<8x128xf32>
    %43 = tpu.matmul %42, %14, %cst_14 {dimension_numbers = #tpu.dot_dimension_numbers<[1], [0], [0], [1], [0, 0, 1, 1], [], []>} : vector<8x128xbf16>, vector<128x128xbf16>, vector<8x128xf32> -> vector<8x128xf32>
    %44 = vector.extract_strided_slice %13 {offsets = [48, 0], sizes = [8, 128], strides = [1, 1]} : vector<64x128xf32> to vector<8x128xf32>
    %45 = arith.addf %44, %43 : vector<8x128xf32>
    %46 = math.tanh %45 : vector<8x128xf32>
    %47 = arith.truncf %46 : vector<8x128xf32> to vector<8x128xbf16>
    %cst_15 = arith.constant dense<0.000000e+00> : vector<8x128xf32>
    %48 = tpu.matmul %47, %14, %cst_15 {dimension_numbers = #tpu.dot_dimension_numbers<[1], [0], [0], [1], [0, 0, 1, 1], [], []>} : vector<8x128xbf16>, vector<128x128xbf16>, vector<8x128xf32> -> vector<8x128xf32>
    %49 = vector.extract_strided_slice %13 {offsets = [56, 0], sizes = [8, 128], strides = [1, 1]} : vector<64x128xf32> to vector<8x128xf32>
    %50 = arith.addf %49, %48 : vector<8x128xf32>
    %51 = math.tanh %50 : vector<8x128xf32>
    %52 = arith.truncf %51 : vector<8x128xf32> to vector<8x128xbf16>
    %c0_16 = arith.constant 0 : index
    %c0_17 = arith.constant 0 : index
    %53 = vector.load %arg4[%c0_16, %c0_17] : memref<128x128xbf16, #tpu.memory_space<vmem>>, vector<128x128xbf16>
    %cst_18 = arith.constant dense<0.000000e+00> : vector<8x128xf32>
    %54 = tpu.matmul %52, %53, %cst_18 {dimension_numbers = #tpu.dot_dimension_numbers<[1], [0], [0], [1], [0, 0, 1, 1], [], []>} : vector<8x128xbf16>, vector<128x128xbf16>, vector<8x128xf32> -> vector<8x128xf32>
    %c0_19 = arith.constant 0 : index
    %c0_20 = arith.constant 0 : index
    %55 = vector.load %arg5[%c0_19, %c0_20] : memref<1x128xf32, #tpu.memory_space<vmem>>, vector<1x128xf32>
    %56 = vector.broadcast %55 : vector<1x128xf32> to vector<8x128xf32>
    %57 = arith.addf %54, %56 : vector<8x128xf32>
    %58 = arith.negf %57 : vector<8x128xf32>
    %59 = math.exp %58 : vector<8x128xf32>
    %cst_21 = arith.constant 1.000000e+00 : f32
    %60 = vector.broadcast %cst_21 : f32 to vector<8x128xf32>
    %61 = arith.addf %60, %59 : vector<8x128xf32>
    %62 = arith.divf %60, %61 : vector<8x128xf32>
    %c0_22 = arith.constant 0 : index
    %c0_23 = arith.constant 0 : index
    %63 = vector.load %arg6[%c0_22, %c0_23] : memref<8x128xf32, #tpu.memory_space<vmem>>, vector<8x128xf32>
    tpu.vector_store %arg6[%c0_22, %c0_23], %62 {strides = array<i32>} : memref<8x128xf32, #tpu.memory_space<vmem>>, vector<8x128xf32>,
    return
  }
}

</mosaic_0001>

<llo_original>
// kernel: _rnn_model_forward_impl.1
$region0: #{_rnn_model_forward_impl.1}
  #allocation0 [shape = 'u32[]', space=smem, size = 0x4, offset = 0x4, fixed_abs, tag = 'smem constant byte address 0x4 - core index']
  #allocation1 [shape = 'u32[144,128]{1,0:T(1,128)}', space=vmem, size = 0x12000, scoped, tag = 'internal scratch']
  %s0 = inlined_call_operand.vmem [shape: f32[64,2], index: 0, kind: input, shape index: {}]
  %s1 = inlined_call_operand.vmem [shape: f32[2,128], index: 1, kind: input, shape index: {}]
  %s2 = inlined_call_operand.vmem [shape: bf16[128,128], index: 2, kind: input, shape index: {}]
  %s3 = inlined_call_operand.vmem [shape: f32[1,128], index: 3, kind: input, shape index: {}]
  %s4 = inlined_call_operand.hbm [shape: bf16[128,128], index: 4, kind: input, shape index: {}]
  %s5 = inlined_call_operand.vmem [shape: f32[1,128], index: 5, kind: input, shape index: {}]
  %s6 = inlined_call_operand.vmem [shape: f32[8,128], index: 6, kind: output, shape index: {}]
  %s7 = sld [smem:[#allocation0]]
  $region38: #{_rnn_model_forward_impl.1} parent=0
    _
  %s9 = ssub.s32 1, %s7
  %s10 = scalar_select 0, %s9, %s7
  $region1: #{_rnn_model_forward_impl.1} parent=0
    #allocation2 [shape = 'u8[32768]{0}', space=vmem, size = 0x8000, scoped, tag = 'input window, operand 4, single buffered']
    #allocation3 [shape = 's32[1]{0}', space=sflag, size = 0x4, scoped, tag = 'scoped memory for _rnn_model_forward_impl.1']
    %11 = vsyncpa [#allocation3], 0
    // Predicated region
    $region2: #{_rnn_model_forward_impl.1} parent=1 // pred_check
      _
    $region3: #{_rnn_model_forward_impl.1} parent=1 // pred_check_branch
      %13 = sbr.rel (0) target = $region5
    $region4: #{_rnn_model_forward_impl.1} parent=1 // pred_region
      _
    $region5: #{_rnn_model_forward_impl.1} parent=1 // pred_fallthru
      _
    // Predicated region
    $region6: #{_rnn_model_forward_impl.1} parent=1 // pred_check
      _
    $region7: #{_rnn_model_forward_impl.1} parent=1 // pred_check_branch
      %15 = sbr.rel (0) target = $region9
    $region8: #{_rnn_model_forward_impl.1} parent=1 // pred_region
      _
    $region9: #{_rnn_model_forward_impl.1} parent=1 // pred_fallthru
      _
    // Predicated region
    $region10: #{_rnn_model_forward_impl.1} parent=1 // pred_check
      _
    $region11: #{_rnn_model_forward_impl.1} parent=1 // pred_check_branch
      %17 = sbr.rel (0) target = $region13
    $region12: #{_rnn_model_forward_impl.1} parent=1 // pred_region
      _
    $region13: #{_rnn_model_forward_impl.1} parent=1 // pred_fallthru
      _
    // Predicated region
    $region14: #{_rnn_model_forward_impl.1} parent=1 // pred_check
      _
    $region15: #{_rnn_model_forward_impl.1} parent=1 // pred_check_branch
      %19 = sbr.rel (0) target = $region17
    $region16: #{_rnn_model_forward_impl.1} parent=1 // pred_region
      _
    $region17: #{_rnn_model_forward_impl.1} parent=1 // pred_fallthru
      _
    // Predicated region
    $region18: #{_rnn_model_forward_impl.1} parent=1 // pred_check
      _
    $region19: #{_rnn_model_forward_impl.1} parent=1 // pred_check_branch
      %21 = sbr.rel (0) target = $region21
    $region20: #{_rnn_model_forward_impl.1} parent=1 // pred_region
      %s23 = ssub.s32 1024, 1024
      %24 = vsyncadd [#allocation3], %s23
      %s25 = sshll.u32 [#allocation2], 4
      %s26 = int_to_ptr.vmem [resolvable:$true] %s25
      %31 = dma.hbm_to_vmem [thread:$0]  %s4, 1024, %s26, [#allocation3], 64, 64, 4
    $region21: #{_rnn_model_forward_impl.1} parent=1 // pred_fallthru
      _
    // Predicated region
    $region22: #{_rnn_model_forward_impl.1} parent=1 // pred_check
      _
    $region23: #{_rnn_model_forward_impl.1} parent=1 // pred_check_branch
      %33 = sbr.rel (0) target = $region25
    $region24: #{_rnn_model_forward_impl.1} parent=1 // pred_region
      _
    $region25: #{_rnn_model_forward_impl.1} parent=1 // pred_fallthru
      _
    // Predicated region
    $region26: #{_rnn_model_forward_impl.1} parent=1 // pred_check
      _
    $region27: #{_rnn_model_forward_impl.1} parent=1 // pred_check_branch
      %35 = sbr.rel (0) target = $region29
    $region28: #{_rnn_model_forward_impl.1} parent=1 // pred_region
      %36 = dma.done [#allocation3], 1024
    $region29: #{_rnn_model_forward_impl.1} parent=1 // pred_fallthru
      _
    %v38 = vld [vmem:[%s3] sm:$0x1]
    %v39 = vld [vmem:[%s0] sm:$0xff]
    %v40 = vld [vmem:[%s0 + $0x8] sm:$0xff]
    %v41 = vld [vmem:[%s0 + $0x10] sm:$0xff]
    %v42 = vld [vmem:[%s0 + $0x18] sm:$0xff]
    %v43 = vld [vmem:[%s0 + $0x20] sm:$0xff]
    %v44 = vld [vmem:[%s0 + $0x28] sm:$0xff]
    %v45 = vld [vmem:[%s0 + $0x30] sm:$0xff]
    %v46 = vld [vmem:[%s0 + $0x38] sm:$0xff]
    %v47 = vld [vmem:[%s1] sm:$0x1]
    %49 = vset.pattern.permute.xlu0 0
    %50 = vperm.xlu0 %49, %v39
    %v51 = vpop.permute.xlu0 %50
    %54 = vset.pattern.permute.xlu0 0
    %55 = vperm.xlu0 %54, %v40
    %v56 = vpop.permute.xlu0 %55
    %59 = vset.pattern.permute.xlu0 0
    %60 = vperm.xlu0 %59, %v41
    %v61 = vpop.permute.xlu0 %60
    %64 = vset.pattern.permute.xlu0 0
    %65 = vperm.xlu0 %64, %v42
    %v66 = vpop.permute.xlu0 %65
    %69 = vset.pattern.permute.xlu0 0
    %70 = vperm.xlu0 %69, %v43
    %v71 = vpop.permute.xlu0 %70
    %74 = vset.pattern.permute.xlu0 0
    %75 = vperm.xlu0 %74, %v44
    %v76 = vpop.permute.xlu0 %75
    %79 = vset.pattern.permute.xlu0 0
    %80 = vperm.xlu0 %79, %v45
    %v81 = vpop.permute.xlu0 %80
    %84 = vset.pattern.permute.xlu0 0
    %85 = vperm.xlu0 %84, %v46
    %v86 = vpop.permute.xlu0 %85
    %v88 = vlaneseq
    %v89 = vshrl.u32 %v88, 7
    %v90 = vsub.s32 0, %v89
    %v91 = vrot.slane %v47, %v90
    %v92 = vmul.f32 %v51, %v91
    %v93 = vmul.f32 %v56, %v91
    %v94 = vmul.f32 %v61, %v91
    %v95 = vmul.f32 %v66, %v91
    %v96 = vmul.f32 %v71, %v91
    %v97 = vmul.f32 %v76, %v91
    %v98 = vmul.f32 %v81, %v91
    %v99 = vmul.f32 %v86, %v91
    %v101 = vlaneseq
    %v102 = vshrl.u32 %v101, 7
    %v103 = vsub.s32 0, %v102
    %v104 = vrot.slane %v38, %v103
    %v106 = vadd.f32 %v104, %v92
    %v107 = vadd.f32 %v104, %v93
    %v108 = vadd.f32 %v104, %v94
    %v109 = vadd.f32 %v104, %v95
    %v110 = vadd.f32 %v104, %v96
    %v111 = vadd.f32 %v104, %v97
    %v112 = vadd.f32 %v104, %v98
    %v113 = vadd.f32 %v104, %v99
    %v114 = vld [vmem:[%s1 + $0x1] sm:$0x1]
    %115 = vset.pattern.permute.xlu0 1
    %116 = vperm.xlu0 %115, %v39
    %v117 = vpop.permute.xlu0 %116
    %119 = vset.pattern.permute.xlu0 1
    %120 = vperm.xlu0 %119, %v40
    %v121 = vpop.permute.xlu0 %120
    %123 = vset.pattern.permute.xlu0 1
    %124 = vperm.xlu0 %123, %v41
    %v125 = vpop.permute.xlu0 %124
    %127 = vset.pattern.permute.xlu0 1
    %128 = vperm.xlu0 %127, %v42
    %v129 = vpop.permute.xlu0 %128
    %131 = vset.pattern.permute.xlu0 1
    %132 = vperm.xlu0 %131, %v43
    %v133 = vpop.permute.xlu0 %132
    %135 = vset.pattern.permute.xlu0 1
    %136 = vperm.xlu0 %135, %v44
    %v137 = vpop.permute.xlu0 %136
    %139 = vset.pattern.permute.xlu0 1
    %140 = vperm.xlu0 %139, %v45
    %v141 = vpop.permute.xlu0 %140
    %143 = vset.pattern.permute.xlu0 1
    %144 = vperm.xlu0 %143, %v46
    %v145 = vpop.permute.xlu0 %144
    %v147 = vlaneseq
    %v148 = vshrl.u32 %v147, 7
    %v149 = vsub.s32 0, %v148
    %v150 = vrot.slane %v114, %v149
    %v151 = vmul.f32 %v117, %v150
    %v152 = vmul.f32 %v121, %v150
    %v153 = vmul.f32 %v125, %v150
    %v154 = vmul.f32 %v129, %v150
    %v155 = vmul.f32 %v133, %v150
    %v156 = vmul.f32 %v137, %v150
    %v157 = vmul.f32 %v141, %v150
    %v158 = vmul.f32 %v145, %v150
    %v159 = vadd.f32 %v106, %v151
    %v160 = vadd.f32 %v107, %v152
    %v161 = vadd.f32 %v108, %v153
    %v162 = vadd.f32 %v109, %v154
    %v163 = vadd.f32 %v110, %v155
    %v164 = vadd.f32 %v111, %v156
    %v165 = vadd.f32 %v112, %v157
    %v166 = vadd.f32 %v113, %v158
    %v167 = vld [vmem:[%s2] sm:$0xf]
    %v168 = vld [vmem:[%s2 + $0x4] sm:$0xf]
    %v169 = vld [vmem:[%s2 + $0x8] sm:$0xf]
    %v170 = vld [vmem:[%s2 + $0xc] sm:$0xf]
    %v171 = vld [vmem:[%s2 + $0x10] sm:$0xf]
    %v172 = vld [vmem:[%s2 + $0x14] sm:$0xf]
    %v173 = vld [vmem:[%s2 + $0x18] sm:$0xf]
    %v174 = vld [vmem:[%s2 + $0x1c] sm:$0xf]
    %v175 = vld [vmem:[%s2 + $0x20] sm:$0xf]
    %v176 = vld [vmem:[%s2 + $0x24] sm:$0xf]
    %v177 = vld [vmem:[%s2 + $0x28] sm:$0xf]
    %v178 = vld [vmem:[%s2 + $0x2c] sm:$0xf]
    %v179 = vld [vmem:[%s2 + $0x30] sm:$0xf]
    %v180 = vld [vmem:[%s2 + $0x34] sm:$0xf]
    %v181 = vld [vmem:[%s2 + $0x38] sm:$0xf]
    %v182 = vld [vmem:[%s2 + $0x3c] sm:$0xf]
    %v183 = vtanh.pop %v159
    %v184 = vpack.c.bf16 %v183, %v183
    %v201 = vunpack.c.l.b16 %v167
    %v202 = vunpack.c.l.b16 %v168
    %v203 = vunpack.c.l.b16 %v169
    %v204 = vunpack.c.l.b16 %v170
    %v205 = vunpack.c.l.b16 %v171
    %v206 = vunpack.c.l.b16 %v172
    %v207 = vunpack.c.l.b16 %v173
    %v208 = vunpack.c.l.b16 %v174
    %v209 = vunpack.c.l.b16 %v175
    %v210 = vunpack.c.l.b16 %v176
    %v211 = vunpack.c.l.b16 %v177
    %v212 = vunpack.c.l.b16 %v178
    %v213 = vunpack.c.l.b16 %v179
    %v214 = vunpack.c.l.b16 %v180
    %v215 = vunpack.c.l.b16 %v181
    %v216 = vunpack.c.l.b16 %v182
    %v217 = vpack.c.b16 %v202, %v201
    %v218 = vpack.c.b16 %v204, %v203
    %v219 = vpack.c.b16 %v206, %v205
    %v220 = vpack.c.b16 %v208, %v207
    %v221 = vpack.c.b16 %v210, %v209
    %v222 = vpack.c.b16 %v212, %v211
    %v223 = vpack.c.b16 %v214, %v213
    %v224 = vpack.c.b16 %v216, %v215
    %233 = vmatprep.subr.bf16.mxu0 0
    %234 = vmatpush1.bf16.msra.mxu0 %v224
    %235 = vmatprep.subr.bf16.mxu0 0
    %236 = vmatpush1.bf16.msra.mxu0 %v223
    %237 = vmatprep.subr.bf16.mxu0 0
    %238 = vmatpush1.bf16.msra.mxu0 %v222
    %239 = vmatprep.subr.bf16.mxu0 0
    %240 = vmatpush1.bf16.msra.mxu0 %v221
    %241 = vmatprep.subr.bf16.mxu0 0
    %242 = vmatpush1.bf16.msra.mxu0 %v220
    %243 = vmatprep.subr.bf16.mxu0 0
    %244 = vmatpush1.bf16.msra.mxu0 %v219
    %245 = vmatprep.subr.bf16.mxu0 0
    %246 = vmatpush1.bf16.msra.mxu0 %v218
    %247 = vmatprep.subr.bf16.mxu0 0
    %248 = vmatpush1.bf16.msra.mxu0 %v217
    %249 = vmatprep.subr.bf16.mxu0 0
    %250 = vmatpush2.bf16.msra.mxu0 0
    %251 = vmatprep.subr.bf16.mxu0 0
    %252 = vmatpush2.bf16.msra.mxu0 0
    %253 = vmatprep.subr.bf16.mxu0 0
    %254 = vmatpush2.bf16.msra.mxu0 0
    %255 = vmatprep.subr.bf16.mxu0 0
    %256 = vmatpush2.bf16.msra.mxu0 0
    %257 = vmatprep.subr.bf16.mxu0 0
    %258 = vmatpush2.bf16.msra.mxu0 0
    %259 = vmatprep.subr.bf16.mxu0 0
    %260 = vmatpush2.bf16.msra.mxu0 0
    %261 = vmatprep.subr.bf16.mxu0 0
    %262 = vmatpush2.bf16.msra.mxu0 0
    %263 = vmatprep.subr.bf16.mxu0 0
    %264 = vmatpush2.bf16.msra.mxu0 0
    %265 = vmatprep.mubr.bf16.mxu0 0
    %266 = vmatmul.mubr.bf16.gmra.mxu0 %v184
    %v267 = vpop.f32.mrf.mxu0
    %v268 = vadd.f32 0.0, %v267
    %v269 = vpop.f32.mrf.mxu0
    %v270 = vpop.f32.mrf.mxu0
    %v271 = vpop.f32.mrf.mxu0
    %272 = vdwg.mxu0
    %v273 = vadd.f32 %v160, %v268
    %v274 = vtanh.pop %v273
    %v275 = vpack.c.bf16 %v274, %v274
    %276 = vmatprep.subr.bf16.mxu0 0
    %277 = vmatpush1.bf16.msra.mxu0 %v224
    %278 = vmatprep.subr.bf16.mxu0 0
    %279 = vmatpush1.bf16.msra.mxu0 %v223
    %280 = vmatprep.subr.bf16.mxu0 0
    %281 = vmatpush1.bf16.msra.mxu0 %v222
    %282 = vmatprep.subr.bf16.mxu0 0
    %283 = vmatpush1.bf16.msra.mxu0 %v221
    %284 = vmatprep.subr.bf16.mxu0 0
    %285 = vmatpush1.bf16.msra.mxu0 %v220
    %286 = vmatprep.subr.bf16.mxu0 0
    %287 = vmatpush1.bf16.msra.mxu0 %v219
    %288 = vmatprep.subr.bf16.mxu0 0
    %289 = vmatpush1.bf16.msra.mxu0 %v218
    %290 = vmatprep.subr.bf16.mxu0 0
    %291 = vmatpush1.bf16.msra.mxu0 %v217
    %292 = vmatprep.subr.bf16.mxu0 0
    %293 = vmatpush2.bf16.msra.mxu0 0
    %294 = vmatprep.subr.bf16.mxu0 0
    %295 = vmatpush2.bf16.msra.mxu0 0
    %296 = vmatprep.subr.bf16.mxu0 0
    %297 = vmatpush2.bf16.msra.mxu0 0
    %298 = vmatprep.subr.bf16.mxu0 0
    %299 = vmatpush2.bf16.msra.mxu0 0
    %300 = vmatprep.subr.bf16.mxu0 0
    %301 = vmatpush2.bf16.msra.mxu0 0
    %302 = vmatprep.subr.bf16.mxu0 0
    %303 = vmatpush2.bf16.msra.mxu0 0
    %304 = vmatprep.subr.bf16.mxu0 0
    %305 = vmatpush2.bf16.msra.mxu0 0
    %306 = vmatprep.subr.bf16.mxu0 0
    %307 = vmatpush2.bf16.msra.mxu0 0
    %308 = vmatprep.mubr.bf16.mxu0 0
    %309 = vmatmul.mubr.bf16.gmra.mxu0 %v275
    %v310 = vpop.f32.mrf.mxu0
    %v311 = vadd.f32 0.0, %v310
    %v312 = vpop.f32.mrf.mxu0
    %v313 = vpop.f32.mrf.mxu0
    %v314 = vpop.f32.mrf.mxu0
    %315 = vdwg.mxu0
    %v316 = vadd.f32 %v161, %v311
    %v317 = vtanh.pop %v316
    %v318 = vpack.c.bf16 %v317, %v317
    %319 = vmatprep.subr.bf16.mxu0 0
    %320 = vmatpush1.bf16.msra.mxu0 %v224
    %321 = vmatprep.subr.bf16.mxu0 0
    %322 = vmatpush1.bf16.msra.mxu0 %v223
    %323 = vmatprep.subr.bf16.mxu0 0
    %324 = vmatpush1.bf16.msra.mxu0 %v222
    %325 = vmatprep.subr.bf16.mxu0 0
    %326 = vmatpush1.bf16.msra.mxu0 %v221
    %327 = vmatprep.subr.bf16.mxu0 0
    %328 = vmatpush1.bf16.msra.mxu0 %v220
    %329 = vmatprep.subr.bf16.mxu0 0
    %330 = vmatpush1.bf16.msra.mxu0 %v219
    %331 = vmatprep.subr.bf16.mxu0 0
    %332 = vmatpush1.bf16.msra.mxu0 %v218
    %333 = vmatprep.subr.bf16.mxu0 0
    %334 = vmatpush1.bf16.msra.mxu0 %v217
    %335 = vmatprep.subr.bf16.mxu0 0
    %336 = vmatpush2.bf16.msra.mxu0 0
    %337 = vmatprep.subr.bf16.mxu0 0
    %338 = vmatpush2.bf16.msra.mxu0 0
    %339 = vmatprep.subr.bf16.mxu0 0
    %340 = vmatpush2.bf16.msra.mxu0 0
    %341 = vmatprep.subr.bf16.mxu0 0
    %342 = vmatpush2.bf16.msra.mxu0 0
    %343 = vmatprep.subr.bf16.mxu0 0
    %344 = vmatpush2.bf16.msra.mxu0 0
    %345 = vmatprep.subr.bf16.mxu0 0
    %346 = vmatpush2.bf16.msra.mxu0 0
    %347 = vmatprep.subr.bf16.mxu0 0
    %348 = vmatpush2.bf16.msra.mxu0 0
    %349 = vmatprep.subr.bf16.mxu0 0
    %350 = vmatpush2.bf16.msra.mxu0 0
    %351 = vmatprep.mubr.bf16.mxu0 0
    %352 = vmatmul.mubr.bf16.gmra.mxu0 %v318
    %v353 = vpop.f32.mrf.mxu0
    %v354 = vadd.f32 0.0, %v353
    %v355 = vpop.f32.mrf.mxu0
    %v356 = vpop.f32.mrf.mxu0
    %v357 = vpop.f32.mrf.mxu0
    %358 = vdwg.mxu0
    %v359 = vadd.f32 %v162, %v354
    %v360 = vtanh.pop %v359
    %v361 = vpack.c.bf16 %v360, %v360
    %362 = vmatprep.subr.bf16.mxu0 0
    %363 = vmatpush1.bf16.msra.mxu0 %v224
    %364 = vmatprep.subr.bf16.mxu0 0
    %365 = vmatpush1.bf16.msra.mxu0 %v223
    %366 = vmatprep.subr.bf16.mxu0 0
    %367 = vmatpush1.bf16.msra.mxu0 %v222
    %368 = vmatprep.subr.bf16.mxu0 0
    %369 = vmatpush1.bf16.msra.mxu0 %v221
    %370 = vmatprep.subr.bf16.mxu0 0
    %371 = vmatpush1.bf16.msra.mxu0 %v220
    %372 = vmatprep.subr.bf16.mxu0 0
    %373 = vmatpush1.bf16.msra.mxu0 %v219
    %374 = vmatprep.subr.bf16.mxu0 0
    %375 = vmatpush1.bf16.msra.mxu0 %v218
    %376 = vmatprep.subr.bf16.mxu0 0
    %377 = vmatpush1.bf16.msra.mxu0 %v217
    %378 = vmatprep.subr.bf16.mxu0 0
    %379 = vmatpush2.bf16.msra.mxu0 0
    %380 = vmatprep.subr.bf16.mxu0 0
    %381 = vmatpush2.bf16.msra.mxu0 0
    %382 = vmatprep.subr.bf16.mxu0 0
    %383 = vmatpush2.bf16.msra.mxu0 0
    %384 = vmatprep.subr.bf16.mxu0 0
    %385 = vmatpush2.bf16.msra.mxu0 0
    %386 = vmatprep.subr.bf16.mxu0 0
    %387 = vmatpush2.bf16.msra.mxu0 0
    %388 = vmatprep.subr.bf16.mxu0 0
    %389 = vmatpush2.bf16.msra.mxu0 0
    %390 = vmatprep.subr.bf16.mxu0 0
    %391 = vmatpush2.bf16.msra.mxu0 0
    %392 = vmatprep.subr.bf16.mxu0 0
    %393 = vmatpush2.bf16.msra.mxu0 0
    %394 = vmatprep.mubr.bf16.mxu0 0
    %395 = vmatmul.mubr.bf16.gmra.mxu0 %v361
    %v396 = vpop.f32.mrf.mxu0
    %v397 = vadd.f32 0.0, %v396
    %v398 = vpop.f32.mrf.mxu0
    %v399 = vpop.f32.mrf.mxu0
    %v400 = vpop.f32.mrf.mxu0
    %401 = vdwg.mxu0
    %v402 = vadd.f32 %v163, %v397
    %v403 = vtanh.pop %v402
    %v404 = vpack.c.bf16 %v403, %v403
    %405 = vmatprep.subr.bf16.mxu0 0
    %406 = vmatpush1.bf16.msra.mxu0 %v224
    %407 = vmatprep.subr.bf16.mxu0 0
    %408 = vmatpush1.bf16.msra.mxu0 %v223
    %409 = vmatprep.subr.bf16.mxu0 0
    %410 = vmatpush1.bf16.msra.mxu0 %v222
    %411 = vmatprep.subr.bf16.mxu0 0
    %412 = vmatpush1.bf16.msra.mxu0 %v221
    %413 = vmatprep.subr.bf16.mxu0 0
    %414 = vmatpush1.bf16.msra.mxu0 %v220
    %415 = vmatprep.subr.bf16.mxu0 0
    %416 = vmatpush1.bf16.msra.mxu0 %v219
    %417 = vmatprep.subr.bf16.mxu0 0
    %418 = vmatpush1.bf16.msra.mxu0 %v218
    %419 = vmatprep.subr.bf16.mxu0 0
    %420 = vmatpush1.bf16.msra.mxu0 %v217
    %421 = vmatprep.subr.bf16.mxu0 0
    %422 = vmatpush2.bf16.msra.mxu0 0
    %423 = vmatprep.subr.bf16.mxu0 0
    %424 = vmatpush2.bf16.msra.mxu0 0
    %425 = vmatprep.subr.bf16.mxu0 0
    %426 = vmatpush2.bf16.msra.mxu0 0
    %427 = vmatprep.subr.bf16.mxu0 0
    %428 = vmatpush2.bf16.msra.mxu0 0
    %429 = vmatprep.subr.bf16.mxu0 0
    %430 = vmatpush2.bf16.msra.mxu0 0
    %431 = vmatprep.subr.bf16.mxu0 0
    %432 = vmatpush2.bf16.msra.mxu0 0
    %433 = vmatprep.subr.bf16.mxu0 0
    %434 = vmatpush2.bf16.msra.mxu0 0
    %435 = vmatprep.subr.bf16.mxu0 0
    %436 = vmatpush2.bf16.msra.mxu0 0
    %437 = vmatprep.mubr.bf16.mxu0 0
    %438 = vmatmul.mubr.bf16.gmra.mxu0 %v404
    %v439 = vpop.f32.mrf.mxu0
    %v440 = vadd.f32 0.0, %v439
    %v441 = vpop.f32.mrf.mxu0
    %v442 = vpop.f32.mrf.mxu0
    %v443 = vpop.f32.mrf.mxu0
    %444 = vdwg.mxu0
    %v445 = vadd.f32 %v164, %v440
    %v446 = vtanh.pop %v445
    %v447 = vpack.c.bf16 %v446, %v446
    %448 = vmatprep.subr.bf16.mxu0 0
    %449 = vmatpush1.bf16.msra.mxu0 %v224
    %450 = vmatprep.subr.bf16.mxu0 0
    %451 = vmatpush1.bf16.msra.mxu0 %v223
    %452 = vmatprep.subr.bf16.mxu0 0
    %453 = vmatpush1.bf16.msra.mxu0 %v222
    %454 = vmatprep.subr.bf16.mxu0 0
    %455 = vmatpush1.bf16.msra.mxu0 %v221
    %456 = vmatprep.subr.bf16.mxu0 0
    %457 = vmatpush1.bf16.msra.mxu0 %v220
    %458 = vmatprep.subr.bf16.mxu0 0
    %459 = vmatpush1.bf16.msra.mxu0 %v219
    %460 = vmatprep.subr.bf16.mxu0 0
    %461 = vmatpush1.bf16.msra.mxu0 %v218
    %462 = vmatprep.subr.bf16.mxu0 0
    %463 = vmatpush1.bf16.msra.mxu0 %v217
    %464 = vmatprep.subr.bf16.mxu0 0
    %465 = vmatpush2.bf16.msra.mxu0 0
    %466 = vmatprep.subr.bf16.mxu0 0
    %467 = vmatpush2.bf16.msra.mxu0 0
    %468 = vmatprep.subr.bf16.mxu0 0
    %469 = vmatpush2.bf16.msra.mxu0 0
    %470 = vmatprep.subr.bf16.mxu0 0
    %471 = vmatpush2.bf16.msra.mxu0 0
    %472 = vmatprep.subr.bf16.mxu0 0
    %473 = vmatpush2.bf16.msra.mxu0 0
    %474 = vmatprep.subr.bf16.mxu0 0
    %475 = vmatpush2.bf16.msra.mxu0 0
    %476 = vmatprep.subr.bf16.mxu0 0
    %477 = vmatpush2.bf16.msra.mxu0 0
    %478 = vmatprep.subr.bf16.mxu0 0
    %479 = vmatpush2.bf16.msra.mxu0 0
    %480 = vmatprep.mubr.bf16.mxu0 0
    %481 = vmatmul.mubr.bf16.gmra.mxu0 %v447
    %v482 = vpop.f32.mrf.mxu0
    %v483 = vadd.f32 0.0, %v482
    %v484 = vpop.f32.mrf.mxu0
    %v485 = vpop.f32.mrf.mxu0
    %v486 = vpop.f32.mrf.mxu0
    %487 = vdwg.mxu0
    %v488 = vadd.f32 %v165, %v483
    %v489 = vtanh.pop %v488
    %v490 = vpack.c.bf16 %v489, %v489
    %491 = vmatprep.subr.bf16.mxu0 0
    %492 = vmatpush1.bf16.msra.mxu0 %v224
    %493 = vmatprep.subr.bf16.mxu0 0
    %494 = vmatpush1.bf16.msra.mxu0 %v223
    %495 = vmatprep.subr.bf16.mxu0 0
    %496 = vmatpush1.bf16.msra.mxu0 %v222
    %497 = vmatprep.subr.bf16.mxu0 0
    %498 = vmatpush1.bf16.msra.mxu0 %v221
    %499 = vmatprep.subr.bf16.mxu0 0
    %500 = vmatpush1.bf16.msra.mxu0 %v220
    %501 = vmatprep.subr.bf16.mxu0 0
    %502 = vmatpush1.bf16.msra.mxu0 %v219
    %503 = vmatprep.subr.bf16.mxu0 0
    %504 = vmatpush1.bf16.msra.mxu0 %v218
    %505 = vmatprep.subr.bf16.mxu0 0
    %506 = vmatpush1.bf16.msra.mxu0 %v217
    %507 = vmatprep.subr.bf16.mxu0 0
    %508 = vmatpush2.bf16.msra.mxu0 0
    %509 = vmatprep.subr.bf16.mxu0 0
    %510 = vmatpush2.bf16.msra.mxu0 0
    %511 = vmatprep.subr.bf16.mxu0 0
    %512 = vmatpush2.bf16.msra.mxu0 0
    %513 = vmatprep.subr.bf16.mxu0 0
    %514 = vmatpush2.bf16.msra.mxu0 0
    %515 = vmatprep.subr.bf16.mxu0 0
    %516 = vmatpush2.bf16.msra.mxu0 0
    %517 = vmatprep.subr.bf16.mxu0 0
    %518 = vmatpush2.bf16.msra.mxu0 0
    %519 = vmatprep.subr.bf16.mxu0 0
    %520 = vmatpush2.bf16.msra.mxu0 0
    %521 = vmatprep.subr.bf16.mxu0 0
    %522 = vmatpush2.bf16.msra.mxu0 0
    %523 = vmatprep.mubr.bf16.mxu0 0
    %524 = vmatmul.mubr.bf16.gmra.mxu0 %v490
    %v525 = vpop.f32.mrf.mxu0
    %v526 = vadd.f32 0.0, %v525
    %v527 = vpop.f32.mrf.mxu0
    %v528 = vpop.f32.mrf.mxu0
    %v529 = vpop.f32.mrf.mxu0
    %530 = vdwg.mxu0
    %v531 = vadd.f32 %v166, %v526
    %v532 = vtanh.pop %v531
    %v533 = vpack.c.bf16 %v532, %v532
    %v534 = vld [vmem:[#allocation2] sm:$0xf]
    %v535 = vld [vmem:[#allocation2 + $0x4] sm:$0xf]
    %v536 = vld [vmem:[#allocation2 + $0x8] sm:$0xf]
    %v537 = vld [vmem:[#allocation2 + $0xc] sm:$0xf]
    %v538 = vld [vmem:[#allocation2 + $0x10] sm:$0xf]
    %v539 = vld [vmem:[#allocation2 + $0x14] sm:$0xf]
    %v540 = vld [vmem:[#allocation2 + $0x18] sm:$0xf]
    %v541 = vld [vmem:[#allocation2 + $0x1c] sm:$0xf]
    %v542 = vld [vmem:[#allocation2 + $0x20] sm:$0xf]
    %v543 = vld [vmem:[#allocation2 + $0x24] sm:$0xf]
    %v544 = vld [vmem:[#allocation2 + $0x28] sm:$0xf]
    %v545 = vld [vmem:[#allocation2 + $0x2c] sm:$0xf]
    %v546 = vld [vmem:[#allocation2 + $0x30] sm:$0xf]
    %v547 = vld [vmem:[#allocation2 + $0x34] sm:$0xf]
    %v548 = vld [vmem:[#allocation2 + $0x38] sm:$0xf]
    %v549 = vld [vmem:[#allocation2 + $0x3c] sm:$0xf]
    %v550 = vld [vmem:[%s5] sm:$0x1]
    %v552 = vlaneseq
    %v553 = vshrl.u32 %v552, 7
    %v554 = vsub.s32 0, %v553
    %v555 = vrot.slane %v550, %v554
    %v573 = vunpack.c.l.b16 %v534
    %v574 = vunpack.c.l.b16 %v535
    %v575 = vunpack.c.l.b16 %v536
    %v576 = vunpack.c.l.b16 %v537
    %v577 = vunpack.c.l.b16 %v538
    %v578 = vunpack.c.l.b16 %v539
    %v579 = vunpack.c.l.b16 %v540
    %v580 = vunpack.c.l.b16 %v541
    %v581 = vunpack.c.l.b16 %v542
    %v582 = vunpack.c.l.b16 %v543
    %v583 = vunpack.c.l.b16 %v544
    %v584 = vunpack.c.l.b16 %v545
    %v585 = vunpack.c.l.b16 %v546
    %v586 = vunpack.c.l.b16 %v547
    %v587 = vunpack.c.l.b16 %v548
    %v588 = vunpack.c.l.b16 %v549
    %v589 = vpack.c.b16 %v574, %v573
    %v590 = vpack.c.b16 %v576, %v575
    %v591 = vpack.c.b16 %v578, %v577
    %v592 = vpack.c.b16 %v580, %v579
    %v593 = vpack.c.b16 %v582, %v581
    %v594 = vpack.c.b16 %v584, %v583
    %v595 = vpack.c.b16 %v586, %v585
    %v596 = vpack.c.b16 %v588, %v587
    %605 = vmatprep.subr.bf16.mxu0 0
    %606 = vmatpush1.bf16.msra.mxu0 %v596
    %607 = vmatprep.subr.bf16.mxu0 0
    %608 = vmatpush1.bf16.msra.mxu0 %v595
    %609 = vmatprep.subr.bf16.mxu0 0
    %610 = vmatpush1.bf16.msra.mxu0 %v594
    %611 = vmatprep.subr.bf16.mxu0 0
    %612 = vmatpush1.bf16.msra.mxu0 %v593
    %613 = vmatprep.subr.bf16.mxu0 0
    %614 = vmatpush1.bf16.msra.mxu0 %v592
    %615 = vmatprep.subr.bf16.mxu0 0
    %616 = vmatpush1.bf16.msra.mxu0 %v591
    %617 = vmatprep.subr.bf16.mxu0 0
    %618 = vmatpush1.bf16.msra.mxu0 %v590
    %619 = vmatprep.subr.bf16.mxu0 0
    %620 = vmatpush1.bf16.msra.mxu0 %v589
    %621 = vmatprep.subr.bf16.mxu0 0
    %622 = vmatpush2.bf16.msra.mxu0 0
    %623 = vmatprep.subr.bf16.mxu0 0
    %624 = vmatpush2.bf16.msra.mxu0 0
    %625 = vmatprep.subr.bf16.mxu0 0
    %626 = vmatpush2.bf16.msra.mxu0 0
    %627 = vmatprep.subr.bf16.mxu0 0
    %628 = vmatpush2.bf16.msra.mxu0 0
    %629 = vmatprep.subr.bf16.mxu0 0
    %630 = vmatpush2.bf16.msra.mxu0 0
    %631 = vmatprep.subr.bf16.mxu0 0
    %632 = vmatpush2.bf16.msra.mxu0 0
    %633 = vmatprep.subr.bf16.mxu0 0
    %634 = vmatpush2.bf16.msra.mxu0 0
    %635 = vmatprep.subr.bf16.mxu0 0
    %636 = vmatpush2.bf16.msra.mxu0 0
    %637 = vmatprep.mubr.bf16.mxu0 0
    %638 = vmatmul.mubr.bf16.gmra.mxu0 %v533
    %v639 = vpop.f32.mrf.mxu0
    %v640 = vadd.f32 %v555, %v639
    %v641 = vpop.f32.mrf.mxu0
    %v642 = vpop.f32.mrf.mxu0
    %v643 = vpop.f32.mrf.mxu0
    %644 = vdwg.mxu0
    %v645 = vxor.u32 %v640, 2147483648
    %v646 = vmul.f32 %v645, 1.442695
    %v647 = vpow.pop %v646
    %v648 = vadd.f32 %v647, 1.0
    %v649 = vrcp.pop %v648
    %v650 = vmul.f32 1.0, %v649
    %651 = vst [vmem:[%s6] sm:$0xff] %v650
    // Predicated region
    $region30: #{_rnn_model_forward_impl.1} parent=1 // pred_check
      _
    $region31: #{_rnn_model_forward_impl.1} parent=1 // pred_check_branch
      %653 = sbr.rel (0) target = $region33
    $region32: #{_rnn_model_forward_impl.1} parent=1 // pred_region
      _
    $region33: #{_rnn_model_forward_impl.1} parent=1 // pred_fallthru
      _
    // Predicated region
    $region34: #{_rnn_model_forward_impl.1} parent=1 // pred_check
      _
    $region35: #{_rnn_model_forward_impl.1} parent=1 // pred_check_branch
      %655 = sbr.rel (0) target = $region37
    $region36: #{_rnn_model_forward_impl.1} parent=1 // pred_region
      _
    $region37: #{_rnn_model_forward_impl.1} parent=1 // pred_fallthru
      _
    %656 = vsyncpa [#allocation3], 1

</llo_original>
